<compile_context>
chip_gen: v7x
topology: tpu7x:2x2x1
jax: 0.10.0
libtpu: 0.0.40
codegen_flags: <defaults>
</compile_context>

<pallas_src>
import functools
import math

import jax
import jax.numpy as jnp
from jax import lax
from jax.experimental import pallas as pl
from jax.experimental.pallas import tpu as pltpu

CUTOFF = 5.0  # rc, matches CutoffLayer(cutoff) buffer


def _radial_kernel(d_ref, o_ref, *, cutoff, n_edges, needs_mask):
    # d_ref: (1, tile_e) float32  -- distances, edges on the 128-lane axis
    # o_ref: (C, tile_e)          -- lane-dense output block
    tile_e = d_ref.shape[-1]
    n_channel = o_ref.shape[0]

    d = d_ref[...]                                            # (1, tile_e)

    if needs_mask:
        # Replace padded tail lanes of the last block with a safe distance so the
        # (discarded) padding never produces inf/nan. Only traced when E % tile != 0.
        i = pl.program_id(0)
        lane = lax.broadcasted_iota(jnp.int32, d.shape, 1)
        valid = (i * tile_e + lane) < n_edges
        d = jnp.where(valid, d, jnp.float32(1.0))

    # ---- one fused per-edge scalar factor s = sqrt(2/rc) * cutoff_fn(d) / d --------
    inv_d = pl.reciprocal(d, approx=True)                     # EUP vrcp (free slot)
    inv_d = inv_d * (2.0 - d * inv_d)                         # 1 Newton step -> ~f32

    theta = (jnp.pi / cutoff) * d                             # base angle, (1, tile_e)
    cos_t = jnp.cos(theta)                                    # shared by cutoff + recurrence
    sin_t = jnp.sin(theta)                                    # the ONLY sin in the kernel

    cut = 0.5 * (cos_t + 1.0)
    cut = jnp.where(d < cutoff, cut, 0.0)
    s = (jnp.float32(math.sqrt(2.0 / cutoff)) * cut) * inv_d  # (1, tile_e)

    # ---- sin(n*theta), n = 1..C, via Chebyshev recurrence (no per-channel sin) -----
    two_cos = 2.0 * cos_t
    sin_prev = jnp.zeros_like(sin_t)                          # sin(0*theta)
    sin_cur = sin_t                                           # sin(1*theta)
    for n in range(n_channel):                                # static unroll, C is small
        o_ref[pl.ds(n, 1), :] = (s * sin_cur).astype(o_ref.dtype)
        sin_prev, sin_cur = sin_cur, two_cos * sin_cur - sin_prev


def radial_layer_forward(distances, n_channel, *, cutoff=CUTOFF, tile_e=32768,
                         out_dtype=jnp.float32, channels_last=False):
    """distances: (E,) float.

    Returns (n_channel, E) lane-dense by default (recommended: consume directly,
    e.g. as a transposed matmul operand). channels_last=True returns the nn.Module
    layout (E, n_channel) at the cost of one extra XLA transpose pass over HBM.
    """
    e = distances.shape[0]
    d_row = distances.reshape(1, e).astype(jnp.float32)

    if e <= 128:
        tile = e                               # single full-extent block (tiny E)
    else:
        assert tile_e % 128 == 0, "tile_e must be a multiple of 128 when tiling"
        # Cap the tile so the grid has >= 2 steps: keeps the "parallel" edge axis
        # shardable across the 2 TensorCores on v7x for medium E.
        cap = max(128, -(-((e + 1) // 2) // 128) * 128)
        tile = min(tile_e, cap)
    grid_n = pl.cdiv(e, tile)
    needs_mask = (e % tile) != 0

    # Explicit VMEM budget: double-buffered in+out blocks plus headroom for
    # elementwise intermediates; stays well under v7x's 64 MiB physical VMEM.
    in_bytes = tile * 4
    out_bytes = n_channel * tile * jnp.dtype(out_dtype).itemsize
    vmem_limit = int(min(110 << 20, max(32 << 20, 4 * (in_bytes + out_bytes))))

    kernel = functools.partial(
        _radial_kernel, cutoff=float(cutoff), n_edges=e, needs_mask=needs_mask)

    out_ce = pl.pallas_call(
        kernel,
        out_shape=jax.ShapeDtypeStruct((n_channel, e), out_dtype),
        grid_spec=pltpu.PrefetchScalarGridSpec(
            num_scalar_prefetch=0,
            grid=(grid_n,),
            in_specs=[pl.BlockSpec((1, tile), lambda i: (0, i))],
            out_specs=pl.BlockSpec((n_channel, tile), lambda i: (0, i)),
        ),
        compiler_params=pltpu.CompilerParams(
            dimension_semantics=("parallel",),
            vmem_limit_bytes=vmem_limit,
        ),
    )(d_row)

    if channels_last:
        # nn.Module semantics layout (E, C). This is a separate full HBM pass over a
        # lane-sparse array — only use it when the consumer truly needs (E, C).
        return out_ce.T
    return out_ce


def reference_forward(distances, n_channel, cutoff=CUTOFF):
    d = distances[..., None].astype(jnp.float32)              # unsqueeze(-1)
    freqs = jnp.arange(1, n_channel + 1, dtype=jnp.float32) * jnp.pi / cutoff
    radial = jnp.sqrt(2.0 / cutoff) * jnp.sin(d * freqs) / d
    cut = 0.5 * (jnp.cos(jnp.pi * d / cutoff) + 1.0)
    cut = jnp.where(d < cutoff, cut, 0.0)
    return radial * cut                                       # (E, n_channel)


if __name__ == "__main__":
    key = jax.random.PRNGKey(0)
    n_edges = 300      # NOT a multiple of the chosen tile -> exercises the tail mask
    n_channel = 8

    # distances strictly positive, some beyond the cutoff
    distances = jax.random.uniform(
        key, (n_edges,), minval=0.1, maxval=CUTOFF * 1.2, dtype=jnp.float32)

    # Recommended lane-dense path: (C, E), no transpose pass.
    out = radial_layer_forward(distances, n_channel)
    out = jax.block_until_ready(out)
    assert out.shape == (n_channel, n_edges)

    ref = reference_forward(distances, n_channel)              # (E, C) module layout
    max_err = float(jnp.max(jnp.abs(out.T - ref)))
    assert jnp.allclose(out.T, ref, atol=1e-4, rtol=1e-3), (
        f"mismatch vs reference (max abs err {max_err})")

    # Module-layout parity path (extra transpose; kept for nn.Module semantics).
    out_ec = radial_layer_forward(distances, n_channel, channels_last=True)
    out_ec = jax.block_until_ready(out_ec)
    assert out_ec.shape == (n_edges, n_channel)
    assert jnp.allclose(out_ec, ref, atol=1e-4, rtol=1e-3)

    print("KERNEL_OK")
</pallas_src>

<mosaic_0001>
module attributes {stable_mosaic.version = 11 : i64} {
  func.func @_radial_kernel(%arg0: i32, %arg1: memref<1x256xf32, #tpu.memory_space<vmem>>, %arg2: memref<8x256xf32, #tpu.memory_space<vmem>>) attributes {dimension_semantics = [#tpu.dimension_semantics<parallel>], iteration_bounds = array<i64: 2>, scalar_prefetch = 0 : i64, scratch_operands = 0 : i64, tpu.core_type = #tpu.core_type<tc>, window_params = [{transform_indices = @transform_0, window_bounds = array<i64: 1, 256>}, {transform_indices = @transform_1, window_bounds = array<i64: 8, 256>}]} {
    %c0 = arith.constant 0 : index
    %c0_0 = arith.constant 0 : index
    %0 = vector.load %arg1[%c0, %c0_0] : memref<1x256xf32, #tpu.memory_space<vmem>>, vector<1x256xf32>
    %1 = tpu.iota {dimensions = array<i32: 1>} : vector<1x256xi32>
    %c256_i32 = arith.constant 256 : i32
    %2 = arith.muli %arg0, %c256_i32 : i32
    %3 = vector.broadcast %2 : i32 to vector<1x256xi32>
    %4 = arith.addi %3, %1 : vector<1x256xi32>
    %c300_i32 = arith.constant 300 : i32
    %5 = vector.broadcast %c300_i32 : i32 to vector<1x256xi32>
    %6 = arith.cmpi slt, %4, %5 : vector<1x256xi32>
    %cst = arith.constant 1.000000e+00 : f32
    %7 = vector.broadcast %cst : f32 to vector<1x256xf32>
    %8 = arith.select %6, %0, %7 : vector<1x256xi1>, vector<1x256xf32>
    %9 = tpu.reciprocal %8 {approx = true} : vector<1x256xf32> -> vector<1x256xf32>
    %10 = arith.mulf %8, %9 : vector<1x256xf32>
    %cst_1 = arith.constant 2.000000e+00 : f32
    %11 = vector.broadcast %cst_1 : f32 to vector<1x256xf32>
    %12 = arith.subf %11, %10 : vector<1x256xf32>
    %13 = arith.mulf %9, %12 : vector<1x256xf32>
    %cst_2 = arith.constant 0.628318548 : f32
    %14 = vector.broadcast %cst_2 : f32 to vector<1x256xf32>
    %15 = arith.mulf %14, %8 : vector<1x256xf32>
    %16 = math.cos %15 : vector<1x256xf32>
    %17 = math.sin %15 : vector<1x256xf32>
    %cst_3 = arith.constant 1.000000e+00 : f32
    %18 = vector.broadcast %cst_3 : f32 to vector<1x256xf32>
    %19 = arith.addf %16, %18 : vector<1x256xf32>
    %cst_4 = arith.constant 5.000000e-01 : f32
    %20 = vector.broadcast %cst_4 : f32 to vector<1x256xf32>
    %21 = arith.mulf %20, %19 : vector<1x256xf32>
    %cst_5 = arith.constant 5.000000e+00 : f32
    %22 = vector.broadcast %cst_5 : f32 to vector<1x256xf32>
    %23 = arith.cmpf olt, %8, %22 : vector<1x256xf32>
    %cst_6 = arith.constant 0.000000e+00 : f32
    %24 = vector.broadcast %cst_6 : f32 to vector<1x256xf32>
    %25 = arith.select %23, %21, %24 : vector<1x256xi1>, vector<1x256xf32>
    %cst_7 = arith.constant 0.632455527 : f32
    %26 = vector.broadcast %cst_7 : f32 to vector<1x256xf32>
    %27 = arith.mulf %26, %25 : vector<1x256xf32>
    %28 = arith.mulf %27, %13 : vector<1x256xf32>
    %cst_8 = arith.constant 2.000000e+00 : f32
    %29 = vector.broadcast %cst_8 : f32 to vector<1x256xf32>
    %30 = arith.mulf %29, %16 : vector<1x256xf32>
    %cst_9 = arith.constant 0.000000e+00 : f32
    %31 = vector.broadcast %cst_9 : f32 to vector<1x256xf32>
    %32 = arith.mulf %28, %17 : vector<1x256xf32>
    %c0_10 = arith.constant 0 : index
    %c0_11 = arith.constant 0 : index
    %33 = vector.load %arg2[%c0_10, %c0_11] : memref<8x256xf32, #tpu.memory_space<vmem>>, vector<1x256xf32>
    tpu.vector_store %arg2[%c0_10, %c0_11], %32 {strides = array<i32>} : memref<8x256xf32, #tpu.memory_space<vmem>>, vector<1x256xf32>,
    %34 = arith.mulf %30, %17 : vector<1x256xf32>
    %35 = arith.subf %34, %31 : vector<1x256xf32>
    %36 = arith.mulf %28, %35 : vector<1x256xf32>
    %c1 = arith.constant 1 : index
    %c0_12 = arith.constant 0 : index
    %37 = vector.load %arg2[%c1, %c0_12] : memref<8x256xf32, #tpu.memory_space<vmem>>, vector<1x256xf32>
    tpu.vector_store %arg2[%c1, %c0_12], %36 {strides = array<i32>} : memref<8x256xf32, #tpu.memory_space<vmem>>, vector<1x256xf32>,
    %38 = arith.mulf %30, %35 : vector<1x256xf32>
    %39 = arith.subf %38, %17 : vector<1x256xf32>
    %40 = arith.mulf %28, %39 : vector<1x256xf32>
    %c2 = arith.constant 2 : index
    %c0_13 = arith.constant 0 : index
    %41 = vector.load %arg2[%c2, %c0_13] : memref<8x256xf32, #tpu.memory_space<vmem>>, vector<1x256xf32>
    tpu.vector_store %arg2[%c2, %c0_13], %40 {strides = array<i32>} : memref<8x256xf32, #tpu.memory_space<vmem>>, vector<1x256xf32>,
    %42 = arith.mulf %30, %39 : vector<1x256xf32>
    %43 = arith.subf %42, %35 : vector<1x256xf32>
    %44 = arith.mulf %28, %43 : vector<1x256xf32>
    %c3 = arith.constant 3 : index
    %c0_14 = arith.constant 0 : index
    %45 = vector.load %arg2[%c3, %c0_14] : memref<8x256xf32, #tpu.memory_space<vmem>>, vector<1x256xf32>
    tpu.vector_store %arg2[%c3, %c0_14], %44 {strides = array<i32>} : memref<8x256xf32, #tpu.memory_space<vmem>>, vector<1x256xf32>,
    %46 = arith.mulf %30, %43 : vector<1x256xf32>
    %47 = arith.subf %46, %39 : vector<1x256xf32>
    %48 = arith.mulf %28, %47 : vector<1x256xf32>
    %c4 = arith.constant 4 : index
    %c0_15 = arith.constant 0 : index
    %49 = vector.load %arg2[%c4, %c0_15] : memref<8x256xf32, #tpu.memory_space<vmem>>, vector<1x256xf32>
    tpu.vector_store %arg2[%c4, %c0_15], %48 {strides = array<i32>} : memref<8x256xf32, #tpu.memory_space<vmem>>, vector<1x256xf32>,
    %50 = arith.mulf %30, %47 : vector<1x256xf32>
    %51 = arith.subf %50, %43 : vector<1x256xf32>
    %52 = arith.mulf %28, %51 : vector<1x256xf32>
    %c5 = arith.constant 5 : index
    %c0_16 = arith.constant 0 : index
    %53 = vector.load %arg2[%c5, %c0_16] : memref<8x256xf32, #tpu.memory_space<vmem>>, vector<1x256xf32>
    tpu.vector_store %arg2[%c5, %c0_16], %52 {strides = array<i32>} : memref<8x256xf32, #tpu.memory_space<vmem>>, vector<1x256xf32>,
    %54 = arith.mulf %30, %51 : vector<1x256xf32>
    %55 = arith.subf %54, %47 : vector<1x256xf32>
    %56 = arith.mulf %28, %55 : vector<1x256xf32>
    %c6 = arith.constant 6 : index
    %c0_17 = arith.constant 0 : index
    %57 = vector.load %arg2[%c6, %c0_17] : memref<8x256xf32, #tpu.memory_space<vmem>>, vector<1x256xf32>
    tpu.vector_store %arg2[%c6, %c0_17], %56 {strides = array<i32>} : memref<8x256xf32, #tpu.memory_space<vmem>>, vector<1x256xf32>,
    %58 = arith.mulf %30, %55 : vector<1x256xf32>
    %59 = arith.subf %58, %51 : vector<1x256xf32>
    %60 = arith.mulf %28, %59 : vector<1x256xf32>
    %c7 = arith.constant 7 : index
    %c0_18 = arith.constant 0 : index
    %61 = vector.load %arg2[%c7, %c0_18] : memref<8x256xf32, #tpu.memory_space<vmem>>, vector<1x256xf32>
    tpu.vector_store %arg2[%c7, %c0_18], %60 {strides = array<i32>} : memref<8x256xf32, #tpu.memory_space<vmem>>, vector<1x256xf32>,
    return
  }
  func.func @transform_0(%arg0: i32) -> (i32, i32) {
    %c0_i32 = arith.constant 0 : i32
    %c0_i32_0 = arith.constant 0 : i32
    return %c0_i32, %arg0 : i32, i32
  }
  func.func @transform_1(%arg0: i32) -> (i32, i32) {
    %c0_i32 = arith.constant 0 : i32
    %c0_i32_0 = arith.constant 0 : i32
    return %c0_i32, %arg0 : i32, i32
  }
}

</mosaic_0001>

<llo_original>
// kernel: tpu_custom_call.1
$region0: #{tpu_custom_call.1}
  #allocation0 [shape = 'u32[]', space=smem, size = 0x4, offset = 0x4, fixed_abs, tag = 'smem constant byte address 0x4 - core index']
  #allocation1 [shape = 'u32[144,128]{1,0:T(1,128)}', space=vmem, size = 0x12000, scoped, tag = 'internal scratch']
  %s0 = inlined_call_operand.hbm [shape: f32[1,300], index: 0, kind: input, shape index: {}]
  %s1 = inlined_call_operand.hbm [shape: f32[8,300], index: 1, kind: output, shape index: {}]
  %s2 = sld [smem:[#allocation0]]
  $region41: #{tpu_custom_call.1} parent=0
    _
  %s4 = ssub.s32 1, %s2
  %s5 = scalar_select 0, %s4, %s2
  $region1: #{tpu_custom_call.1} parent=0
    #allocation2 [shape = 'u8[2048]{0}', space=vmem, size = 0x800, scoped, tag = 'input window, operand 0']
    #allocation3 [shape = 's32[2]{0}', space=sflag, size = 0x8, scoped, tag = 'scoped memory for tpu_custom_call.1']
    #allocation4 [shape = 's32[2]{0}', space=sflag, size = 0x8, scoped, tag = 'scoped memory for tpu_custom_call.1']
    #allocation5 [shape = 'u8[16384]{0}', space=vmem, size = 0x4000, scoped, tag = 'output window, operand 0']
    %6 = vsyncpa [#allocation3], 0
    %s7 = scalar_lea.sflag [#allocation3], 1
    %8 = vsyncpa %s7, 0
    %9 = vsyncpa [#allocation4], 0
    %s10 = scalar_lea.sflag [#allocation4], 1
    %11 = vsyncpa %s10, 0
    loop: start=0, step=1, limit=4
    $region2: #{tpu_custom_call.1} parent=1 // loop_pre_header
      _
    $region3: #{tpu_custom_call.1} parent=1 // loop_header
      %s13 = sphi 0, %s17
      %p14 = scmp.ge.s32.totalorder %s13, 4
      %s23 = sphi 0, %s25
      %s26 = sphi 0, %s23
      %s27 = sphi 0, %s26
      %s43 = sphi 0, %s27
      %s49 = sphi 0, %s51
      %s52 = sphi 0, %s49
      %s53 = sphi 0, %s52
      %s69 = sphi 0, %s53
    $region4: #{tpu_custom_call.1} parent=1 // loop_header_branch
      %16 = sbr.rel (%p14) target = $region8
    $region5: #{tpu_custom_call.1} parent=1 // loop_body
      %s18 = ssub.s32 %s13, 1
      %s19 = ssub.s32 %s13, 2
      %s20 = sadd.s32 %s13, 1
      %s21 = ssub.s32 %s13, %s20
      %p22 = scmp.eq.s32.totalorder %s21, 0
      %s24 = sadd.s32 %s23, 1
      %s25 = scalar_select %p22, %s23, %s24
      %p28 = pneg %p22
      %p29 = scmp.eq.s32.totalorder %s13, 1
      %p30 = por %p28, %p29
      %p31 = scmp.ne.s32.totalorder %s23, %s26
      %p32 = scmp.eq.s32.totalorder %s13, 0
      %p33 = por %p31, %p32
      %p34 = scmp.ne.s32.totalorder %s23, %s26
      %p35 = scmp.eq.s32.totalorder %s18, 1
      %p36 = por %p34, %p35
      %p37 = scmp.ne.s32.totalorder %s26, %s27
      %p38 = scmp.eq.s32.totalorder %s18, 0
      %p39 = por %p37, %p38
      %p40 = scmp.ne.s32.totalorder %s26, %s27
      %p41 = scmp.eq.s32.totalorder %s19, 1
      %p42 = por %p40, %p41
      %p44 = scmp.ne.s32.totalorder %s27, %s43
      %p45 = scmp.eq.s32.totalorder %s19, 0
      %p46 = por %p44, %p45
      %s47 = ssub.s32 %s13, %s20
      %p48 = scmp.eq.s32.totalorder %s47, 0
      %s50 = sadd.s32 %s49, 1
      %s51 = scalar_select %p48, %s49, %s50
      %p54 = pneg %p48
      %p55 = scmp.eq.s32.totalorder %s13, 1
      %p56 = por %p54, %p55
      %p57 = scmp.ne.s32.totalorder %s49, %s52
      %p58 = scmp.eq.s32.totalorder %s13, 0
      %p59 = por %p57, %p58
      %p60 = scmp.ne.s32.totalorder %s49, %s52
      %p61 = scmp.eq.s32.totalorder %s18, 1
      %p62 = por %p60, %p61
      %p63 = scmp.ne.s32.totalorder %s52, %s53
      %p64 = scmp.eq.s32.totalorder %s18, 0
      %p65 = por %p63, %p64
      %p66 = scmp.ne.s32.totalorder %s52, %s53
      %p67 = scmp.eq.s32.totalorder %s19, 1
      %p68 = por %p66, %p67
      %p70 = scmp.ne.s32.totalorder %s53, %s69
      %p71 = scmp.eq.s32.totalorder %s19, 0
      %p72 = por %p70, %p71
      %p73 = scmp.le.s32.totalorder 1, %s13
      %p74 = scmp.lt.s32.totalorder %s13, 3
      %p75 = pnand %p73, %p74
      %p76 = pneg %p75
      // Predicated region
      $region9: #{tpu_custom_call.1} parent=5 // pred_check
        _
      $region10: #{tpu_custom_call.1} parent=5 // pred_check_branch
        %78 = sbr.rel (%p75) target = $region12
      $region11: #{tpu_custom_call.1} parent=5 // pred_region
        %s79 = ssub.s32 %s13, 1
      $region12: #{tpu_custom_call.1} parent=5 // pred_fallthru
        _
      %p80 = scmp.lt.s32.totalorder %s13, 2
      // Predicated region
      $region13: #{tpu_custom_call.1} parent=5 // pred_check
        %p81 = pneg %p80
      $region14: #{tpu_custom_call.1} parent=5 // pred_check_branch
        %83 = sbr.rel (%p81) target = $region16
      $region15: #{tpu_custom_call.1} parent=5 // pred_region
        // Predicated region
        $region17: #{tpu_custom_call.1} parent=15 // pred_check
          %p84 = pneg %p33
        $region18: #{tpu_custom_call.1} parent=15 // pred_check_branch
          %86 = sbr.rel (%p84) target = $region20
        $region19: #{tpu_custom_call.1} parent=15 // pred_region
          %s87 = sand.u32 %s23, 1
          %s88 = scalar_lea.sflag [#allocation3], %s87
          %s89 = sand.u32 %s23, 1
          %s90 = smul.addr %s89, 2
          %s91 = scalar_lea.vmem [#allocation2], %s90
          %s92 = smul.u32 2, %s13
          %s93 = ssub.s32 3, %s92
          %p94 = scmp.lt.s32.totalorder %s93, 2
          %s95 = scalar_select %p94, %s93, 2
          %s96 = smul.u32 16, %s95
          %s98 = ssub.s32 32, %s96
          %99 = vsyncadd %s88, %s98
          %p100 = scmp.ne.s32.totalorder 0, %s96
          %s101 = smul.addr %s92, 16
          %s102 = scalar_lea.hbm %s0, %s101
          %s103 = sshll.u32 %s95, 4
          %s104 = sshll.u32 %s91, 4
          %s105 = int_to_ptr.vmem [resolvable:$true] %s104
          %107 = dma.hbm_to_vmem [thread:$0]  (%p100), %s102, %s103, %s105, %s88
        $region20: #{tpu_custom_call.1} parent=15 // pred_fallthru
          _
      $region16: #{tpu_custom_call.1} parent=5 // pred_fallthru
        _
      %p108 = scmp.le.s32.totalorder 1, %s13
      %p109 = scmp.lt.s32.totalorder %s13, 3
      %p110 = pnand %p108, %p109
      %p111 = pneg %p110
      // Predicated region
      $region21: #{tpu_custom_call.1} parent=5 // pred_check
        _
      $region22: #{tpu_custom_call.1} parent=5 // pred_check_branch
        %113 = sbr.rel (%p110) target = $region24
      $region23: #{tpu_custom_call.1} parent=5 // pred_region
        %s114 = ssub.s32 %s13, 1
        %s115 = sand.u32 %s26, 1
        %s116 = scalar_lea.sflag [#allocation3], %s115
        %s117 = sand.u32 %s26, 1
        %s118 = smul.addr %s117, 2
        %s119 = scalar_lea.vmem [#allocation2], %s118
        // Predicated region
        $region25: #{tpu_custom_call.1} parent=23 // pred_check
          %p120 = pneg %p39
        $region26: #{tpu_custom_call.1} parent=23 // pred_check_branch
          %122 = sbr.rel (%p120) target = $region28
        $region27: #{tpu_custom_call.1} parent=23 // pred_region
          %123 = dma.done %s116, 32
        $region28: #{tpu_custom_call.1} parent=23 // pred_fallthru
          _
        %s124 = sand.u32 %s26, 1
        %s125 = scalar_lea.sflag [#allocation3], %s124
        %s126 = sand.u32 %s26, 1
        %s127 = smul.addr %s126, 2
        %s128 = scalar_lea.vmem [#allocation2], %s127
        %p129 = pneg %p39
        %p130 = pneg %p36
        %p131 = pneg %p65
        %p132 = pneg %p62
        %s133 = sand.u32 %s52, 1
        %s134 = scalar_lea.sflag [#allocation4], %s133
        %s135 = sand.u32 %s52, 1
        %s136 = smul.addr %s135, 16
        %s137 = scalar_lea.vmem [#allocation5], %s136
        %s138 = smul.u32 2, %s18
        %s139 = ssub.s32 3, %s138
        %p140 = scmp.lt.s32.totalorder %s139, 2
        %s141 = scalar_select %p140, %s139, 2
        %s142 = smul.u32 16, %s141
        %s143 = smul.u32 2, %s18
        %s144 = ssub.s32 3, %s143
        %p145 = scmp.lt.s32.totalorder %s144, 2
        %s146 = scalar_select %p145, %s144, 2
        %s147 = smul.u32 128, %s146
        %v148 = vld [vmem:[%s119] sm:$0x3]
        %v149 = vlaneseq
        %v150 = vand.u32 %v149, 127
        %v151 = vadd.s32 %v150, 128
        %s152 = smul.u32 %s18, 256
        %v153 = vstv %s152
        %v154 = vadd.s32 %v153, %v150
        %v155 = vadd.s32 %v153, %v151
        %vm156 = vcmp.lt.s32.totalorder %v154, 300
        %vm157 = vcmp.lt.s32.totalorder %v155, 300
        %v159 = vlaneseq
        %v160 = vshrl.u32 %v159, 7
        %v161 = vsub.s32 0, %v160
        %v162 = vrot.slane %v148, %v161
        %v163 = vlaneseq
        %v164 = vshrl.u32 %v163, 7
        %v165 = vsub.s32 1, %v164
        %v166 = vrot.slane %v148, %v165
        %v169 = vsel %vm156, %v162, 1.0
        %v170 = vsel %vm157, %v166, 1.0
        %v171 = vrcp.pop %v169
        %v172 = vrcp.pop %v170
        %v173 = vmul.f32 %v169, %v171
        %v174 = vmul.f32 %v170, %v172
        %v175 = vsub.f32 2.0, %v173
        %v176 = vsub.f32 2.0, %v174
        %v177 = vmul.f32 %v171, %v175
        %v178 = vmul.f32 %v172, %v176
        %v179 = vmul.f32 %v169, 0.62831855
        %v180 = vmul.f32 %v170, 0.62831855
        %v181 = vand.u32 2147483647, %v179
        %vm182 = vcmp.le.f32.partialorder %v181, 0.7853982
        %vm183 = vcmp.lt.s32.totalorder %v179, 0
        %v184 = vand.u32 %v179, 2139095040
        %v185 = vshrl.u32 %v184, 23
        %v186 = vsub.s32 %v185, 127
        %v187 = vand.u32 2147483647, %v179
        %v188 = vand.u32 %v187, 8388607
        %v189 = vor.u32 %v188, 8388608
        %v190 = vsub.s32 0, %v189
        %v191 = vadd.s32 %v186, 1
        %vm192 = vcmp.gt.s32.totalorder %v191, 0
        %v193 = vsel %vm192, %v191, 0
        %v194 = vshrl.u32 %v193, 5
        %v195 = vand.u32 %v193, 31
        %v196 = vsub.s32 32, %v195
        %v197 = vshrl.u32 683565275, %v196
        %v198 = vshll.u32 683565275, %v195
        %v199 = vshrl.u32 2475754826, %v196
        %v200 = vor.u32 %v198, %v199
        %v201 = vshll.u32 2475754826, %v195
        %v202 = vshrl.u32 2131351028, %v196
        %v203 = vor.u32 %v201, %v202
        %v204 = vshll.u32 2131351028, %v195
        %v205 = vshrl.u32 2102212464, %v196
        %v206 = vor.u32 %v204, %v205
        %v207 = vshll.u32 2102212464, %v195
        %v208 = vshrl.u32 920167782, %v196
        %v209 = vor.u32 %v207, %v208
        %v210 = vshll.u32 920167782, %v195
        %v211 = vshrl.u32 1326507024, %v196
        %v212 = vor.u32 %v210, %v211
        %vm213 = vcmp.lt.s32.totalorder %v194, 1
        %vm214 = vcmp.lt.s32.totalorder %v194, 2
        %vm215 = vcmp.lt.s32.totalorder %v194, 3
        %vm216 = vcmp.lt.s32.totalorder %v194, 4
        %v217 = vsel %vm213, %v197, %v200
        %v218 = vsel %vm216, %v206, 2102212464
        %v219 = vsel %vm215, %v203, %v218
        %v220 = vsel %vm214, %v217, %v219
        %v221 = vsel %vm213, %v200, %v203
        %v222 = vsel %vm216, %v209, 920167782
        %v223 = vsel %vm215, %v206, %v222
        %v224 = vsel %vm214, %v221, %v223
        %v225 = vsel %vm213, %v203, %v206
        %v226 = vsel %vm216, %v212, 1326507024
        %v227 = vsel %vm215, %v209, %v226
        %v228 = vsel %vm214, %v225, %v227
        %v229 = vshll.u32 %v189, 8
        %v230 = vmul.u32.u64.compose %v229, %v228
        %v231 = vextract.low.u32 %v230
        %v232 = vextract.high.u32 %v230
        %v233 = vmul.u32.u64.compose %v229, %v224
        %v234 = vextract.low.u32 %v233
        %v235 = vextract.high.u32 %v233
        %v236 = vmul.u32 %v229, %v220
        %v237 = vadd.s32 %v232, %v234
        %vm238 = vc.u32 %v232, %v234
        %v239 = vadd.s32 %v235, 1
        %v240 = vsel %vm238, %v239, %v235
        %v241 = vadd.s32 %v236, %v240
        %v242 = vadd.s32 %v241, 536870912
        %v243 = vshrl.u32 %v242, 30
        %v244 = vshll.u32 %v243, 30
        %v245 = vsub.s32 %v241, %v244
        %vm246 = vcmp.lt.s32.totalorder %v245, 0
        %v247 = vsub.s32 0, %v245
        %v248 = vsel %vm246, %v247, %v245
        %v249 = vclz %v248
        %v250 = vsub.s32 %v249, 2
        %vm251 = vcmp.gt.s32.totalorder 0, %v250
        %v252 = vsel %vm251, 0, %v250
        %v253 = vsub.s32 32, %v252
        %v254 = vshll.u32 %v245, %v252
        %v255 = vshrl.u32 %v237, %v253
        %v256 = vor.u32 %v254, %v255
        %v257 = vsub.s32 4294967266, %v252
        %v258 = vadd.s32 %v257, 127
        %v259 = vshll.u32 %v258, 23
        %v260 = vor.u32 4788187, %v259
        %v261 = vand.u32 2147483647, %v260
        %v263 = vcvt.s32.f32 %v256
        %v264 = vmul.f32 %v263, %v261
        %v265 = vxor.u32 %v264, 2147483648
        %v266 = vsel %vm183, %v265, %v264
        %v267 = vsub.s32 4, %v243
        %v268 = vsel %vm183, %v267, %v243
        %v269 = vsel %vm182, %v179, %v266
        %v270 = vsel %vm182, 0, %v268
        %v271 = vcosq.f32.pop %v269
        %v272 = vsinq.f32.pop %v269
        %vm273 = vweird.f32 %v179
        %v274 = vand.u32 %v270, 3
        %vm275 = vcmp.lt.s32.totalorder %v274, 2
        %vm276 = vcmp.eq.s32.totalorder %v274, 0
        %v277 = vxor.u32 %v272, 2147483648
        %v278 = vsel %vm276, %v271, %v277
        %vm279 = vcmp.eq.s32.totalorder %v274, 2
        %v280 = vxor.u32 %v271, 2147483648
        %v281 = vsel %vm279, %v280, %v272
        %v282 = vsel %vm275, %v278, %v281
        %v283 = vsel %vm273, nan, %v282
        %v284 = vand.u32 2147483647, %v180
        %vm285 = vcmp.le.f32.partialorder %v284, 0.7853982
        %vm286 = vcmp.lt.s32.totalorder %v180, 0
        %v287 = vand.u32 %v180, 2139095040
        %v288 = vshrl.u32 %v287, 23
        %v289 = vsub.s32 %v288, 127
        %v290 = vand.u32 2147483647, %v180
        %v291 = vand.u32 %v290, 8388607
        %v292 = vor.u32 %v291, 8388608
        %v293 = vsub.s32 0, %v292
        %v294 = vadd.s32 %v289, 1
        %vm295 = vcmp.gt.s32.totalorder %v294, 0
        %v296 = vsel %vm295, %v294, 0
        %v297 = vshrl.u32 %v296, 5
        %v298 = vand.u32 %v296, 31
        %v299 = vsub.s32 32, %v298
        %v300 = vshrl.u32 683565275, %v299
        %v301 = vshll.u32 683565275, %v298
        %v302 = vshrl.u32 2475754826, %v299
        %v303 = vor.u32 %v301, %v302
        %v304 = vshll.u32 2475754826, %v298
        %v305 = vshrl.u32 2131351028, %v299
        %v306 = vor.u32 %v304, %v305
        %v307 = vshll.u32 2131351028, %v298
        %v308 = vshrl.u32 2102212464, %v299
        %v309 = vor.u32 %v307, %v308
        %v310 = vshll.u32 2102212464, %v298
        %v311 = vshrl.u32 920167782, %v299
        %v312 = vor.u32 %v310, %v311
        %v313 = vshll.u32 920167782, %v298
        %v314 = vshrl.u32 1326507024, %v299
        %v315 = vor.u32 %v313, %v314
        %vm316 = vcmp.lt.s32.totalorder %v297, 1
        %vm317 = vcmp.lt.s32.totalorder %v297, 2
        %vm318 = vcmp.lt.s32.totalorder %v297, 3
        %vm319 = vcmp.lt.s32.totalorder %v297, 4
        %v320 = vsel %vm316, %v300, %v303
        %v321 = vsel %vm319, %v309, 2102212464
        %v322 = vsel %vm318, %v306, %v321
        %v323 = vsel %vm317, %v320, %v322
        %v324 = vsel %vm316, %v303, %v306
        %v325 = vsel %vm319, %v312, 920167782
        %v326 = vsel %vm318, %v309, %v325
        %v327 = vsel %vm317, %v324, %v326
        %v328 = vsel %vm316, %v306, %v309
        %v329 = vsel %vm319, %v315, 1326507024
        %v330 = vsel %vm318, %v312, %v329
        %v331 = vsel %vm317, %v328, %v330
        %v332 = vshll.u32 %v292, 8
        %v333 = vmul.u32.u64.compose %v332, %v331
        %v334 = vextract.low.u32 %v333
        %v335 = vextract.high.u32 %v333
        %v336 = vmul.u32.u64.compose %v332, %v327
        %v337 = vextract.low.u32 %v336
        %v338 = vextract.high.u32 %v336
        %v339 = vmul.u32 %v332, %v323
        %v340 = vadd.s32 %v335, %v337
        %vm341 = vc.u32 %v335, %v337
        %v342 = vadd.s32 %v338, 1
        %v343 = vsel %vm341, %v342, %v338
        %v344 = vadd.s32 %v339, %v343
        %v345 = vadd.s32 %v344, 536870912
        %v346 = vshrl.u32 %v345, 30
        %v347 = vshll.u32 %v346, 30
        %v348 = vsub.s32 %v344, %v347
        %vm349 = vcmp.lt.s32.totalorder %v348, 0
        %v350 = vsub.s32 0, %v348
        %v351 = vsel %vm349, %v350, %v348
        %v352 = vclz %v351
        %v353 = vsub.s32 %v352, 2
        %vm354 = vcmp.gt.s32.totalorder 0, %v353
        %v355 = vsel %vm354, 0, %v353
        %v356 = vsub.s32 32, %v355
        %v357 = vshll.u32 %v348, %v355
        %v358 = vshrl.u32 %v340, %v356
        %v359 = vor.u32 %v357, %v358
        %v360 = vsub.s32 4294967266, %v355
        %v361 = vadd.s32 %v360, 127
        %v362 = vshll.u32 %v361, 23
        %v363 = vor.u32 4788187, %v362
        %v364 = vand.u32 2147483647, %v363
        %v366 = vcvt.s32.f32 %v359
        %v367 = vmul.f32 %v366, %v364
        %v368 = vxor.u32 %v367, 2147483648
        %v369 = vsel %vm286, %v368, %v367
        %v370 = vsub.s32 4, %v346
        %v371 = vsel %vm286, %v370, %v346
        %v372 = vsel %vm285, %v180, %v369
        %v373 = vsel %vm285, 0, %v371
        %v374 = vcosq.f32.pop %v372
        %v375 = vsinq.f32.pop %v372
        %vm376 = vweird.f32 %v180
        %v377 = vand.u32 %v373, 3
        %vm378 = vcmp.lt.s32.totalorder %v377, 2
        %vm379 = vcmp.eq.s32.totalorder %v377, 0
        %v380 = vxor.u32 %v375, 2147483648
        %v381 = vsel %vm379, %v374, %v380
        %vm382 = vcmp.eq.s32.totalorder %v377, 2
        %v383 = vxor.u32 %v374, 2147483648
        %v384 = vsel %vm382, %v383, %v375
        %v385 = vsel %vm378, %v381, %v384
        %v386 = vsel %vm376, nan, %v385
        %v387 = vand.u32 2147483647, %v179
        %vm388 = vcmp.le.f32.partialorder %v387, 0.7853982
        %vm389 = vcmp.lt.s32.totalorder %v179, 0
        %v390 = vand.u32 %v179, 2139095040
        %v391 = vshrl.u32 %v390, 23
        %v392 = vsub.s32 %v391, 127
        %v393 = vand.u32 2147483647, %v179
        %v394 = vand.u32 %v393, 8388607
        %v395 = vor.u32 %v394, 8388608
        %v396 = vsub.s32 0, %v395
        %v397 = vadd.s32 %v392, 1
        %vm398 = vcmp.gt.s32.totalorder %v397, 0
        %v399 = vsel %vm398, %v397, 0
        %v400 = vshrl.u32 %v399, 5
        %v401 = vand.u32 %v399, 31
        %v402 = vsub.s32 32, %v401
        %v403 = vshrl.u32 683565275, %v402
        %v404 = vshll.u32 683565275, %v401
        %v405 = vshrl.u32 2475754826, %v402
        %v406 = vor.u32 %v404, %v405
        %v407 = vshll.u32 2475754826, %v401
        %v408 = vshrl.u32 2131351028, %v402
        %v409 = vor.u32 %v407, %v408
        %v410 = vshll.u32 2131351028, %v401
        %v411 = vshrl.u32 2102212464, %v402
        %v412 = vor.u32 %v410, %v411
        %v413 = vshll.u32 2102212464, %v401
        %v414 = vshrl.u32 920167782, %v402
        %v415 = vor.u32 %v413, %v414
        %v416 = vshll.u32 920167782, %v401
        %v417 = vshrl.u32 1326507024, %v402
        %v418 = vor.u32 %v416, %v417
        %vm419 = vcmp.lt.s32.totalorder %v400, 1
        %vm420 = vcmp.lt.s32.totalorder %v400, 2
        %vm421 = vcmp.lt.s32.totalorder %v400, 3
        %vm422 = vcmp.lt.s32.totalorder %v400, 4
        %v423 = vsel %vm419, %v403, %v406
        %v424 = vsel %vm422, %v412, 2102212464
        %v425 = vsel %vm421, %v409, %v424
        %v426 = vsel %vm420, %v423, %v425
        %v427 = vsel %vm419, %v406, %v409
        %v428 = vsel %vm422, %v415, 920167782
        %v429 = vsel %vm421, %v412, %v428
        %v430 = vsel %vm420, %v427, %v429
        %v431 = vsel %vm419, %v409, %v412
        %v432 = vsel %vm422, %v418, 1326507024
        %v433 = vsel %vm421, %v415, %v432
        %v434 = vsel %vm420, %v431, %v433
        %v435 = vshll.u32 %v395, 8
        %v436 = vmul.u32.u64.compose %v435, %v434
        %v437 = vextract.low.u32 %v436
        %v438 = vextract.high.u32 %v436
        %v439 = vmul.u32.u64.compose %v435, %v430
        %v440 = vextract.low.u32 %v439
        %v441 = vextract.high.u32 %v439
        %v442 = vmul.u32 %v435, %v426
        %v443 = vadd.s32 %v438, %v440
        %vm444 = vc.u32 %v438, %v440
        %v445 = vadd.s32 %v441, 1
        %v446 = vsel %vm444, %v445, %v441
        %v447 = vadd.s32 %v442, %v446
        %v448 = vadd.s32 %v447, 536870912
        %v449 = vshrl.u32 %v448, 30
        %v450 = vshll.u32 %v449, 30
        %v451 = vsub.s32 %v447, %v450
        %vm452 = vcmp.lt.s32.totalorder %v451, 0
        %v453 = vsub.s32 0, %v451
        %v454 = vsel %vm452, %v453, %v451
        %v455 = vclz %v454
        %v456 = vsub.s32 %v455, 2
        %vm457 = vcmp.gt.s32.totalorder 0, %v456
        %v458 = vsel %vm457, 0, %v456
        %v459 = vsub.s32 32, %v458
        %v460 = vshll.u32 %v451, %v458
        %v461 = vshrl.u32 %v443, %v459
        %v462 = vor.u32 %v460, %v461
        %v463 = vsub.s32 4294967266, %v458
        %v464 = vadd.s32 %v463, 127
        %v465 = vshll.u32 %v464, 23
        %v466 = vor.u32 4788187, %v465
        %v467 = vand.u32 2147483647, %v466
        %v469 = vcvt.s32.f32 %v462
        %v470 = vmul.f32 %v469, %v467
        %v471 = vxor.u32 %v470, 2147483648
        %v472 = vsel %vm389, %v471, %v470
        %v473 = vsub.s32 4, %v449
        %v474 = vsel %vm389, %v473, %v449
        %v475 = vsel %vm388, %v179, %v472
        %v476 = vsel %vm388, 0, %v474
        %v477 = vcosq.f32.pop %v475
        %v478 = vsinq.f32.pop %v475
        %vm479 = vweird.f32 %v179
        %v480 = vadd.s32 %v476, 3
        %v481 = vand.u32 %v480, 3
        %vm482 = vcmp.lt.s32.totalorder %v481, 2
        %vm483 = vcmp.eq.s32.totalorder %v481, 0
        %v484 = vxor.u32 %v478, 2147483648
        %v485 = vsel %vm483, %v477, %v484
        %vm486 = vcmp.eq.s32.totalorder %v481, 2
        %v487 = vxor.u32 %v477, 2147483648
        %v488 = vsel %vm486, %v487, %v478
        %v489 = vsel %vm482, %v485, %v488
        %v490 = vsel %vm479, nan, %v489
        %v491 = vand.u32 2147483647, %v180
        %vm492 = vcmp.le.f32.partialorder %v491, 0.7853982
        %vm493 = vcmp.lt.s32.totalorder %v180, 0
        %v494 = vand.u32 %v180, 2139095040
        %v495 = vshrl.u32 %v494, 23
        %v496 = vsub.s32 %v495, 127
        %v497 = vand.u32 2147483647, %v180
        %v498 = vand.u32 %v497, 8388607
        %v499 = vor.u32 %v498, 8388608
        %v500 = vsub.s32 0, %v499
        %v501 = vadd.s32 %v496, 1
        %vm502 = vcmp.gt.s32.totalorder %v501, 0
        %v503 = vsel %vm502, %v501, 0
        %v504 = vshrl.u32 %v503, 5
        %v505 = vand.u32 %v503, 31
        %v506 = vsub.s32 32, %v505
        %v507 = vshrl.u32 683565275, %v506
        %v508 = vshll.u32 683565275, %v505
        %v509 = vshrl.u32 2475754826, %v506
        %v510 = vor.u32 %v508, %v509
        %v511 = vshll.u32 2475754826, %v505
        %v512 = vshrl.u32 2131351028, %v506
        %v513 = vor.u32 %v511, %v512
        %v514 = vshll.u32 2131351028, %v505
        %v515 = vshrl.u32 2102212464, %v506
        %v516 = vor.u32 %v514, %v515
        %v517 = vshll.u32 2102212464, %v505
        %v518 = vshrl.u32 920167782, %v506
        %v519 = vor.u32 %v517, %v518
        %v520 = vshll.u32 920167782, %v505
        %v521 = vshrl.u32 1326507024, %v506
        %v522 = vor.u32 %v520, %v521
        %vm523 = vcmp.lt.s32.totalorder %v504, 1
        %vm524 = vcmp.lt.s32.totalorder %v504, 2
        %vm525 = vcmp.lt.s32.totalorder %v504, 3
        %vm526 = vcmp.lt.s32.totalorder %v504, 4
        %v527 = vsel %vm523, %v507, %v510
        %v528 = vsel %vm526, %v516, 2102212464
        %v529 = vsel %vm525, %v513, %v528
        %v530 = vsel %vm524, %v527, %v529
        %v531 = vsel %vm523, %v510, %v513
        %v532 = vsel %vm526, %v519, 920167782
        %v533 = vsel %vm525, %v516, %v532
        %v534 = vsel %vm524, %v531, %v533
        %v535 = vsel %vm523, %v513, %v516
        %v536 = vsel %vm526, %v522, 1326507024
        %v537 = vsel %vm525, %v519, %v536
        %v538 = vsel %vm524, %v535, %v537
        %v539 = vshll.u32 %v499, 8
        %v540 = vmul.u32.u64.compose %v539, %v538
        %v541 = vextract.low.u32 %v540
        %v542 = vextract.high.u32 %v540
        %v543 = vmul.u32.u64.compose %v539, %v534
        %v544 = vextract.low.u32 %v543
        %v545 = vextract.high.u32 %v543
        %v546 = vmul.u32 %v539, %v530
        %v547 = vadd.s32 %v542, %v544
        %vm548 = vc.u32 %v542, %v544
        %v549 = vadd.s32 %v545, 1
        %v550 = vsel %vm548, %v549, %v545
        %v551 = vadd.s32 %v546, %v550
        %v552 = vadd.s32 %v551, 536870912
        %v553 = vshrl.u32 %v552, 30
        %v554 = vshll.u32 %v553, 30
        %v555 = vsub.s32 %v551, %v554
        %vm556 = vcmp.lt.s32.totalorder %v555, 0
        %v557 = vsub.s32 0, %v555
        %v558 = vsel %vm556, %v557, %v555
        %v559 = vclz %v558
        %v560 = vsub.s32 %v559, 2
        %vm561 = vcmp.gt.s32.totalorder 0, %v560
        %v562 = vsel %vm561, 0, %v560
        %v563 = vsub.s32 32, %v562
        %v564 = vshll.u32 %v555, %v562
        %v565 = vshrl.u32 %v547, %v563
        %v566 = vor.u32 %v564, %v565
        %v567 = vsub.s32 4294967266, %v562
        %v568 = vadd.s32 %v567, 127
        %v569 = vshll.u32 %v568, 23
        %v570 = vor.u32 4788187, %v569
        %v571 = vand.u32 2147483647, %v570
        %v573 = vcvt.s32.f32 %v566
        %v574 = vmul.f32 %v573, %v571
        %v575 = vxor.u32 %v574, 2147483648
        %v576 = vsel %vm493, %v575, %v574
        %v577 = vsub.s32 4, %v553
        %v578 = vsel %vm493, %v577, %v553
        %v579 = vsel %vm492, %v180, %v576
        %v580 = vsel %vm492, 0, %v578
        %v581 = vcosq.f32.pop %v579
        %v582 = vsinq.f32.pop %v579
        %vm583 = vweird.f32 %v180
        %v584 = vadd.s32 %v580, 3
        %v585 = vand.u32 %v584, 3
        %vm586 = vcmp.lt.s32.totalorder %v585, 2
        %vm587 = vcmp.eq.s32.totalorder %v585, 0
        %v588 = vxor.u32 %v582, 2147483648
        %v589 = vsel %vm587, %v581, %v588
        %vm590 = vcmp.eq.s32.totalorder %v585, 2
        %v591 = vxor.u32 %v581, 2147483648
        %v592 = vsel %vm590, %v591, %v582
        %v593 = vsel %vm586, %v589, %v592
        %v594 = vsel %vm583, nan, %v593
        %v595 = vadd.f32 %v283, 1.0
        %v596 = vadd.f32 %v386, 1.0
        %v597 = vmul.f32 %v595, 0.5
        %v598 = vmul.f32 %v596, 0.5
        %vm599 = vcmp.lt.f32.partialorder %v169, 5.0
        %vm600 = vcmp.lt.f32.partialorder %v170, 5.0
        %v601 = vsel %vm599, %v597, 0.0
        %v602 = vsel %vm600, %v598, 0.0
        %v603 = vmul.f32 %v601, 0.6324555
        %v604 = vmul.f32 %v602, 0.6324555
        %v605 = vmul.f32 %v603, %v177
        %v606 = vmul.f32 %v604, %v178
        %v607 = vmul.f32 %v283, 2.0
        %v608 = vmul.f32 %v386, 2.0
        %v609 = vmul.f32 %v605, %v490
        %v610 = vmul.f32 %v606, %v594
        %v613 = vcombine.low %v609, %v610
        %v615 = vunpack.c.l.s4 1966171168
        %v616 = vunpack.c.0.s8 %v615
        %v617 = vlaneseq
        %v618 = vshrl.u32 %v617, 7
        %v619 = vsub.s32 %v616, %v618
        %v620 = vrot.slane %v613, %v619
        %v622 = vunpack.c.l.s4 1966171168
        %v623 = vunpack.c.0.s8 %v622
        %v624 = vlaneseq
        %v625 = vshrl.u32 %v624, 7
        %v626 = vsub.s32 %v623, %v625
        %v627 = vrot.slane %v620, %v626
        %v629 = vlaneseq
        %vm630 = vcmp.ge.s32.totalorder %v629, 0
        %vm631 = vcmp.lt.s32.totalorder %v629, 256
        %vm632 = vmand %vm630, %vm631
        %633 = vst.msk [vmem:[%s137] ss:$8 sm:$0x3] %vm632, %v627
        %634 = vst.msk [vmem:[%s137] ss:$8 sm:$0x0] %vm632, %v627
        %v635 = vmul.f32 %v607, %v490
        %v636 = vmul.f32 %v608, %v594
        %v637 = vmul.f32 %v605, %v635
        %v638 = vmul.f32 %v606, %v636
        %v641 = vcombine.low %v637, %v638
        %v643 = vunpack.c.l.s4 1966171168
        %v644 = vunpack.c.0.s8 %v643
        %v645 = vlaneseq
        %v646 = vshrl.u32 %v645, 7
        %v647 = vsub.s32 %v644, %v646
        %v648 = vrot.slane %v641, %v647
        %v650 = vunpack.c.l.s4 1966171168
        %v651 = vunpack.c.0.s8 %v650
        %v652 = vlaneseq
        %v653 = vshrl.u32 %v652, 7
        %v654 = vsub.s32 %v651, %v653
        %v655 = vrot.slane %v648, %v654
        %s657 = scalar_lea.vmem %s137, 1 [#allocation5]
        %658 = vst.msk [vmem:[%s657] ss:$8 sm:$0x3] %vm632, %v655
        %659 = vst.msk [vmem:[%s657] ss:$8 sm:$0x0] %vm632, %v655
        %v660 = vmul.f32 %v607, %v635
        %v661 = vmul.f32 %v608, %v636
        %v662 = vsub.f32 %v660, %v490
        %v663 = vsub.f32 %v661, %v594
        %v664 = vmul.f32 %v605, %v662
        %v665 = vmul.f32 %v606, %v663
        %v668 = vcombine.low %v664, %v665
        %v670 = vunpack.c.l.s4 1966171168
        %v671 = vunpack.c.0.s8 %v670
        %v672 = vlaneseq
        %v673 = vshrl.u32 %v672, 7
        %v674 = vsub.s32 %v671, %v673
        %v675 = vrot.slane %v668, %v674
        %v677 = vunpack.c.l.s4 1966171168
        %v678 = vunpack.c.0.s8 %v677
        %v679 = vlaneseq
        %v680 = vshrl.u32 %v679, 7
        %v681 = vsub.s32 %v678, %v680
        %v682 = vrot.slane %v675, %v681
        %s684 = scalar_lea.vmem %s137, 2 [#allocation5]
        %685 = vst.msk [vmem:[%s684] ss:$8 sm:$0x3] %vm632, %v682
        %686 = vst.msk [vmem:[%s684] ss:$8 sm:$0x0] %vm632, %v682
        %v687 = vmul.f32 %v607, %v662
        %v688 = vmul.f32 %v608, %v663
        %v689 = vsub.f32 %v687, %v635
        %v690 = vsub.f32 %v688, %v636
        %v691 = vmul.f32 %v605, %v689
        %v692 = vmul.f32 %v606, %v690
        %v695 = vcombine.low %v691, %v692
        %v697 = vunpack.c.l.s4 1966171168
        %v698 = vunpack.c.0.s8 %v697
        %v699 = vlaneseq
        %v700 = vshrl.u32 %v699, 7
        %v701 = vsub.s32 %v698, %v700
        %v702 = vrot.slane %v695, %v701
        %v704 = vunpack.c.l.s4 1966171168
        %v705 = vunpack.c.0.s8 %v704
        %v706 = vlaneseq
        %v707 = vshrl.u32 %v706, 7
        %v708 = vsub.s32 %v705, %v707
        %v709 = vrot.slane %v702, %v708
        %s711 = scalar_lea.vmem %s137, 3 [#allocation5]
        %712 = vst.msk [vmem:[%s711] ss:$8 sm:$0x3] %vm632, %v709
        %713 = vst.msk [vmem:[%s711] ss:$8 sm:$0x0] %vm632, %v709
        %v714 = vmul.f32 %v607, %v689
        %v715 = vmul.f32 %v608, %v690
        %v716 = vsub.f32 %v714, %v662
        %v717 = vsub.f32 %v715, %v663
        %v718 = vmul.f32 %v605, %v716
        %v719 = vmul.f32 %v606, %v717
        %v722 = vcombine.low %v718, %v719
        %v724 = vunpack.c.l.s4 1966171168
        %v725 = vunpack.c.0.s8 %v724
        %v726 = vlaneseq
        %v727 = vshrl.u32 %v726, 7
        %v728 = vsub.s32 %v725, %v727
        %v729 = vrot.slane %v722, %v728
        %v731 = vunpack.c.l.s4 1966171168
        %v732 = vunpack.c.0.s8 %v731
        %v733 = vlaneseq
        %v734 = vshrl.u32 %v733, 7
        %v735 = vsub.s32 %v732, %v734
        %v736 = vrot.slane %v729, %v735
        %s738 = scalar_lea.vmem %s137, 4 [#allocation5]
        %739 = vst.msk [vmem:[%s738] ss:$8 sm:$0x3] %vm632, %v736
        %740 = vst.msk [vmem:[%s738] ss:$8 sm:$0x0] %vm632, %v736
        %v741 = vmul.f32 %v607, %v716
        %v742 = vmul.f32 %v608, %v717
        %v743 = vsub.f32 %v741, %v689
        %v744 = vsub.f32 %v742, %v690
        %v745 = vmul.f32 %v605, %v743
        %v746 = vmul.f32 %v606, %v744
        %v749 = vcombine.low %v745, %v746
        %v751 = vunpack.c.l.s4 1966171168
        %v752 = vunpack.c.0.s8 %v751
        %v753 = vlaneseq
        %v754 = vshrl.u32 %v753, 7
        %v755 = vsub.s32 %v752, %v754
        %v756 = vrot.slane %v749, %v755
        %v758 = vunpack.c.l.s4 1966171168
        %v759 = vunpack.c.0.s8 %v758
        %v760 = vlaneseq
        %v761 = vshrl.u32 %v760, 7
        %v762 = vsub.s32 %v759, %v761
        %v763 = vrot.slane %v756, %v762
        %s765 = scalar_lea.vmem %s137, 5 [#allocation5]
        %766 = vst.msk [vmem:[%s765] ss:$8 sm:$0x3] %vm632, %v763
        %767 = vst.msk [vmem:[%s765] ss:$8 sm:$0x0] %vm632, %v763
        %v768 = vmul.f32 %v607, %v743
        %v769 = vmul.f32 %v608, %v744
        %v770 = vsub.f32 %v768, %v716
        %v771 = vsub.f32 %v769, %v717
        %v772 = vmul.f32 %v605, %v770
        %v773 = vmul.f32 %v606, %v771
        %v776 = vcombine.low %v772, %v773
        %v778 = vunpack.c.l.s4 1966171168
        %v779 = vunpack.c.0.s8 %v778
        %v780 = vlaneseq
        %v781 = vshrl.u32 %v780, 7
        %v782 = vsub.s32 %v779, %v781
        %v783 = vrot.slane %v776, %v782
        %v785 = vunpack.c.l.s4 1966171168
        %v786 = vunpack.c.0.s8 %v785
        %v787 = vlaneseq
        %v788 = vshrl.u32 %v787, 7
        %v789 = vsub.s32 %v786, %v788
        %v790 = vrot.slane %v783, %v789
        %s792 = scalar_lea.vmem %s137, 6 [#allocation5]
        %793 = vst.msk [vmem:[%s792] ss:$8 sm:$0x3] %vm632, %v790
        %794 = vst.msk [vmem:[%s792] ss:$8 sm:$0x0] %vm632, %v790
        %v795 = vmul.f32 %v607, %v770
        %v796 = vmul.f32 %v608, %v771
        %v797 = vsub.f32 %v795, %v743
        %v798 = vsub.f32 %v796, %v744
        %v799 = vmul.f32 %v605, %v797
        %v800 = vmul.f32 %v606, %v798
        %v803 = vcombine.low %v799, %v800
        %v805 = vunpack.c.l.s4 1966171168
        %v806 = vunpack.c.0.s8 %v805
        %v807 = vlaneseq
        %v808 = vshrl.u32 %v807, 7
        %v809 = vsub.s32 %v806, %v808
        %v810 = vrot.slane %v803, %v809
        %v812 = vunpack.c.l.s4 1966171168
        %v813 = vunpack.c.0.s8 %v812
        %v814 = vlaneseq
        %v815 = vshrl.u32 %v814, 7
        %v816 = vsub.s32 %v813, %v815
        %v817 = vrot.slane %v810, %v816
        %s819 = scalar_lea.vmem %s137, 7 [#allocation5]
        %820 = vst.msk [vmem:[%s819] ss:$8 sm:$0x3] %vm632, %v817
        %821 = vst.msk [vmem:[%s819] ss:$8 sm:$0x0] %vm632, %v817
        %s822 = sand.u32 %s52, 1
        %s823 = scalar_lea.sflag [#allocation4], %s822
        %s824 = sand.u32 %s52, 1
        %s825 = smul.addr %s824, 16
        %s826 = scalar_lea.vmem [#allocation5], %s825
        // Predicated region
        $region29: #{tpu_custom_call.1} parent=23 // pred_check
          %p827 = pneg %p62
        $region30: #{tpu_custom_call.1} parent=23 // pred_check_branch
          %829 = sbr.rel (%p827) target = $region32
        $region31: #{tpu_custom_call.1} parent=23 // pred_region
          %s830 = smul.u32 2, %s18
          %s831 = ssub.s32 3, %s830
          %p832 = scmp.lt.s32.totalorder %s831, 2
          %s833 = scalar_select %p832, %s831, 2
          %s834 = smul.u32 128, %s833
          %s836 = ssub.s32 256, %s834
          %837 = vsyncadd %s823, %s836
          %p838 = scmp.ne.s32.totalorder 0, %s834
          %s839 = smul.addr %s830, 128
          %s840 = scalar_lea.hbm %s1, %s839
          %s841 = smul.u32 %s833, 8
          %s842 = sshll.u32 %s841, 4
          %s843 = sshll.u32 %s826, 4
          %s844 = int_to_ptr.vmem [resolvable:$true] %s843
          %846 = dma.vmem_to_hbm [thread:$0]  (%p838), %s844, %s842, %s840, %s823
        $region32: #{tpu_custom_call.1} parent=23 // pred_fallthru
          _
      $region24: #{tpu_custom_call.1} parent=5 // pred_fallthru
        _
      %p847 = scmp.le.s32.totalorder 2, %s13
      // Predicated region
      $region33: #{tpu_custom_call.1} parent=5 // pred_check
        %p848 = pneg %p847
      $region34: #{tpu_custom_call.1} parent=5 // pred_check_branch
        %850 = sbr.rel (%p848) target = $region36
      $region35: #{tpu_custom_call.1} parent=5 // pred_region
        %s851 = ssub.s32 %s13, 2
        // Predicated region
        $region37: #{tpu_custom_call.1} parent=35 // pred_check
          %p852 = pneg %p68
        $region38: #{tpu_custom_call.1} parent=35 // pred_check_branch
          %854 = sbr.rel (%p852) target = $region40
        $region39: #{tpu_custom_call.1} parent=35 // pred_region
          %s855 = sand.u32 %s53, 1
          %s856 = scalar_lea.sflag [#allocation4], %s855
          %s857 = sand.u32 %s53, 1
          %s858 = smul.addr %s857, 16
          %s859 = scalar_lea.vmem [#allocation5], %s858
          %860 = dma.done %s856, 256
        $region40: #{tpu_custom_call.1} parent=35 // pred_fallthru
          _
      $region36: #{tpu_custom_call.1} parent=5 // pred_fallthru
        _
    $region6: #{tpu_custom_call.1} parent=1 // loop_footer
      %s17 = sadd.s32 1, %s13
    $region7: #{tpu_custom_call.1} parent=1 // loop_footer_branch
      %12 = sbr.rel target = $region3
    $region8: #{tpu_custom_call.1} parent=1 // loop_exit
      _
    %861 = vsyncpa [#allocation3], 1
    %s862 = scalar_lea.sflag [#allocation3], 1
    %863 = vsyncpa %s862, 1
    %864 = vsyncpa [#allocation4], 1
    %s865 = scalar_lea.sflag [#allocation4], 1
    %866 = vsyncpa %s865, 1

</llo_original>
